<compile_context>
chip_gen: v7x
topology: tpu7x:2x2x1
jax: 0.10.0
libtpu: 0.0.40
codegen_flags: <defaults>
</compile_context>

<pallas_src>
import jax
import jax.numpy as jnp
from jax.experimental import pallas as pl
from jax.experimental.pallas import tpu as pltpu

_EPS = 1e-8  # matches F.normalize default used by the module's forward


def _round_up(x, m):
    return (x + m - 1) // m * m


def _make_l2_kernel(C):
    unroll_channels = C <= 8  # under-filled sublane vreg -> keep reduce on VPU

    def kernel(x_ref, o_ref):
        # x_ref block view: (C, HW_T)  (batch dim squeezed away)
        x = x_ref[...].astype(jnp.float32)
        if unroll_channels:
            sq = x[0:1, :] * x[0:1, :]
            for c in range(1, C):
                sq = sq + x[c:c + 1, :] * x[c:c + 1, :]
        else:
            sq = jnp.sum(x * x, axis=0, keepdims=True)        # (1, HW_T)
        # 1 / max(sqrt(sq), eps)  ==  rsqrt(max(sq, eps^2))  since sq >= 0
        inv = jax.lax.rsqrt(jnp.maximum(sq, jnp.float32(_EPS * _EPS)))
        o_ref[...] = (x * inv).astype(o_ref.dtype)

    return kernel


def _choose_hw_tile(C, hw_p, itemsize):
    # Budget ~8 MiB for the 4 pipelined buffers (2 in + 2 out), each C*HW_T*itemsize.
    budget_bytes = 8 * 1024 * 1024
    per_lane_bytes = 4 * C * itemsize
    max_lanes = max(1, budget_bytes // per_lane_bytes)
    hw_t = max(128, (max_lanes // 128) * 128)   # multiple of 128 (lane-dense)
    hw_t = min(hw_t, 8192, hw_p)                # cap; never exceed padded extent
    return int(hw_t)


def normalize(x):
    """L2-normalize over dim=1 of an NCHW tensor, matching F.normalize(x, 2, 1, 1e-8)."""
    N, C, H, W = x.shape
    hw = H * W
    x2 = x.reshape(N, C, hw)

    # Pad the lane axis to a multiple of 128 so all stores are unmasked.
    hw_p = _round_up(hw, 128)
    if hw_p != hw:
        x2 = jnp.pad(x2, ((0, 0), (0, 0), (0, hw_p - hw)))

    itemsize = jnp.dtype(x.dtype).itemsize
    hw_t = _choose_hw_tile(C, hw_p, itemsize)
    n_hw_tiles = pl.cdiv(hw_p, hw_t)

    in_spec = pl.BlockSpec((pl.Squeezed(), C, hw_t), lambda n, j: (n, 0, j))
    out_spec = pl.BlockSpec((pl.Squeezed(), C, hw_t), lambda n, j: (n, 0, j))

    cost = pl.CostEstimate(
        flops=int(3 * N * C * hw_p),
        transcendentals=int(N * hw_p),
        bytes_accessed=int(2 * N * C * hw_p * itemsize),
    )

    out = pl.pallas_call(
        _make_l2_kernel(C),
        out_shape=jax.ShapeDtypeStruct((N, C, hw_p), x.dtype),
        grid_spec=pl.GridSpec(
            grid=(N, n_hw_tiles),
            in_specs=[in_spec],
            out_specs=out_spec,
        ),
        compiler_params=pltpu.CompilerParams(
            dimension_semantics=("parallel", "parallel"),
            vmem_limit_bytes=32 * 1024 * 1024,
        ),
        cost_estimate=cost,
    )(x2)

    if hw_p != hw:
        out = out[:, :, :hw]
    return out.reshape(N, C, H, W)


def _reference(x):
    # pure-JAX reference mirroring F.normalize(x, p=2, dim=1, eps=1e-8)
    norm = jnp.sqrt(jnp.sum(x.astype(jnp.float32) ** 2, axis=1, keepdims=True))
    return (x / jnp.maximum(norm, _EPS)).astype(x.dtype)


if __name__ == "__main__":
    key = jax.random.PRNGKey(0)
    x = jax.random.normal(key, (2, 4, 16, 16), dtype=jnp.float32)

    y = normalize(x)
    jax.block_until_ready(y)

    y_ref = _reference(x)
    assert y.shape == x.shape and y.dtype == x.dtype
    assert jnp.allclose(y, y_ref, atol=1e-5, rtol=1e-5)

    print("KERNEL_OK")
</pallas_src>

<mosaic_0001>
module attributes {stable_mosaic.version = 11 : i64} {
  func.func @kernel(%arg0: i32, %arg1: i32, %arg2: memref<1x4x256xf32, #tpu.memory_space<vmem>>, %arg3: memref<1x4x256xf32, #tpu.memory_space<vmem>>) attributes {dimension_semantics = [#tpu.dimension_semantics<parallel>, #tpu.dimension_semantics<parallel>], iteration_bounds = array<i64: 2, 1>, scalar_prefetch = 0 : i64, scratch_operands = 0 : i64, tpu.core_type = #tpu.core_type<tc>, window_params = [{transform_indices = @transform_0, window_bounds = array<i64: 1, 4, 256>}, {transform_indices = @transform_1, window_bounds = array<i64: 1, 4, 256>}]} {
    %c0 = arith.constant 0 : index
    %c0_0 = arith.constant 0 : index
    %c0_1 = arith.constant 0 : index
    %0 = vector.load %arg2[%c0, %c0_0, %c0_1] : memref<1x4x256xf32, #tpu.memory_space<vmem>>, vector<1x4x256xf32>
    %1 = vector.shape_cast %0 : vector<1x4x256xf32> to vector<4x256xf32>
    %2 = vector.extract_strided_slice %1 {offsets = [0, 0], sizes = [1, 256], strides = [1, 1]} : vector<4x256xf32> to vector<1x256xf32>
    %3 = vector.extract_strided_slice %1 {offsets = [0, 0], sizes = [1, 256], strides = [1, 1]} : vector<4x256xf32> to vector<1x256xf32>
    %4 = arith.mulf %2, %3 : vector<1x256xf32>
    %5 = vector.extract_strided_slice %1 {offsets = [1, 0], sizes = [1, 256], strides = [1, 1]} : vector<4x256xf32> to vector<1x256xf32>
    %6 = vector.extract_strided_slice %1 {offsets = [1, 0], sizes = [1, 256], strides = [1, 1]} : vector<4x256xf32> to vector<1x256xf32>
    %7 = arith.mulf %5, %6 : vector<1x256xf32>
    %8 = arith.addf %4, %7 : vector<1x256xf32>
    %9 = vector.extract_strided_slice %1 {offsets = [2, 0], sizes = [1, 256], strides = [1, 1]} : vector<4x256xf32> to vector<1x256xf32>
    %10 = vector.extract_strided_slice %1 {offsets = [2, 0], sizes = [1, 256], strides = [1, 1]} : vector<4x256xf32> to vector<1x256xf32>
    %11 = arith.mulf %9, %10 : vector<1x256xf32>
    %12 = arith.addf %8, %11 : vector<1x256xf32>
    %13 = vector.extract_strided_slice %1 {offsets = [3, 0], sizes = [1, 256], strides = [1, 1]} : vector<4x256xf32> to vector<1x256xf32>
    %14 = vector.extract_strided_slice %1 {offsets = [3, 0], sizes = [1, 256], strides = [1, 1]} : vector<4x256xf32> to vector<1x256xf32>
    %15 = arith.mulf %13, %14 : vector<1x256xf32>
    %16 = arith.addf %12, %15 : vector<1x256xf32>
    %cst = arith.constant 1.000000e-16 : f32
    %17 = vector.broadcast %cst : f32 to vector<1x256xf32>
    %18 = arith.maximumf %16, %17 : vector<1x256xf32>
    %19 = math.rsqrt %18 : vector<1x256xf32>
    %20 = vector.broadcast %19 : vector<1x256xf32> to vector<4x256xf32>
    %21 = arith.mulf %1, %20 : vector<4x256xf32>
    %c0_2 = arith.constant 0 : index
    %c0_3 = arith.constant 0 : index
    %c0_4 = arith.constant 0 : index
    %22 = vector.load %arg3[%c0_2, %c0_3, %c0_4] : memref<1x4x256xf32, #tpu.memory_space<vmem>>, vector<1x4x256xf32>
    %23 = vector.shape_cast %22 : vector<1x4x256xf32> to vector<4x256xf32>
    %24 = vector.shape_cast %21 : vector<4x256xf32> to vector<1x4x256xf32>
    tpu.vector_store %arg3[%c0_2, %c0_3, %c0_4], %24 {strides = array<i32>} : memref<1x4x256xf32, #tpu.memory_space<vmem>>, vector<1x4x256xf32>,
    return
  }
  func.func @transform_0(%arg0: i32, %arg1: i32) -> (i32, i32, i32) {
    %c0_i32 = arith.constant 0 : i32
    %c0_i32_0 = arith.constant 0 : i32
    return %arg0, %c0_i32, %arg1 : i32, i32, i32
  }
  func.func @transform_1(%arg0: i32, %arg1: i32) -> (i32, i32, i32) {
    %c0_i32 = arith.constant 0 : i32
    %c0_i32_0 = arith.constant 0 : i32
    return %arg0, %c0_i32, %arg1 : i32, i32, i32
  }
}

</mosaic_0001>

<llo_original>
// kernel: tpu_custom_call.1
$region0: #{tpu_custom_call.1}
  #allocation0 [shape = 'u32[]', space=smem, size = 0x4, offset = 0x4, fixed_abs, tag = 'smem constant byte address 0x4 - core index']
  #allocation1 [shape = 'u32[144,128]{1,0:T(1,128)}', space=vmem, size = 0x12000, scoped, tag = 'internal scratch']
  %s0 = inlined_call_operand.hbm [shape: f32[2,4,256], index: 0, kind: input, shape index: {}]
  %s1 = inlined_call_operand.hbm [shape: f32[2,4,256], index: 1, kind: output, shape index: {}]
  %s2 = sld [smem:[#allocation0]]
  $region41: #{tpu_custom_call.1} parent=0
    _
  %s4 = ssub.s32 1, %s2
  %s5 = scalar_select 0, %s4, %s2
  $region1: #{tpu_custom_call.1} parent=0
    #allocation2 [shape = 'u8[8192]{0}', space=vmem, size = 0x2000, scoped, tag = 'input window, operand 0']
    #allocation3 [shape = 's32[2]{0}', space=sflag, size = 0x8, scoped, tag = 'scoped memory for tpu_custom_call.1']
    #allocation4 [shape = 's32[2]{0}', space=sflag, size = 0x8, scoped, tag = 'scoped memory for tpu_custom_call.1']
    #allocation5 [shape = 'u8[8192]{0}', space=vmem, size = 0x2000, scoped, tag = 'output window, operand 0']
    %6 = vsyncpa [#allocation3], 0
    %s7 = scalar_lea.sflag [#allocation3], 1
    %8 = vsyncpa %s7, 0
    %9 = vsyncpa [#allocation4], 0
    %s10 = scalar_lea.sflag [#allocation4], 1
    %11 = vsyncpa %s10, 0
    loop: start=0, step=1, limit=4
    $region2: #{tpu_custom_call.1} parent=1 // loop_pre_header
      _
    $region3: #{tpu_custom_call.1} parent=1 // loop_header
      %s13 = sphi 0, %s17
      %p14 = scmp.ge.s32.totalorder %s13, 4
      %s20 = sphi 0, %s32
      %s21 = sphi 0, %s28
      %s22 = sphi 0, %s20
      %s23 = sphi 0, %s21
      %s24 = sphi 0, %s22
      %s25 = sphi 0, %s23
      %s37 = sphi 0, %s39
      %s40 = sphi 0, %s37
      %s41 = sphi 0, %s40
      %s57 = sphi 0, %s41
      %s65 = sphi 0, %s67
      %s68 = sphi 0, %s65
      %s69 = sphi 0, %s68
      %s85 = sphi 0, %s69
    $region4: #{tpu_custom_call.1} parent=1 // loop_header_branch
      %16 = sbr.rel (%p14) target = $region8
    $region5: #{tpu_custom_call.1} parent=1 // loop_body
      %s18 = ssub.s32 %s13, 1
      %s19 = ssub.s32 %s13, 2
      %s26 = sadd.s32 1, %s21
      %p27 = scmp.ge.s32.totalorder %s26, 1
      %s28 = scalar_select %p27, 0, %s26
      %s29 = sadd.s32 1, %s20
      %s30 = scalar_select %p27, %s29, %s20
      %p31 = scmp.ge.s32.totalorder %s30, 2
      %s32 = scalar_select %p31, 0, %s30
      %s33 = ssub.s32 %s20, %s32
      %s34 = ssub.s32 %s21, %s28
      %s35 = sor.u32 %s33, %s34
      %p36 = scmp.eq.s32.totalorder %s35, 0
      %s38 = sadd.s32 %s37, 1
      %s39 = scalar_select %p36, %s37, %s38
      %p42 = pneg %p36
      %p43 = scmp.eq.s32.totalorder %s13, 1
      %p44 = por %p42, %p43
      %p45 = scmp.ne.s32.totalorder %s37, %s40
      %p46 = scmp.eq.s32.totalorder %s13, 0
      %p47 = por %p45, %p46
      %p48 = scmp.ne.s32.totalorder %s37, %s40
      %p49 = scmp.eq.s32.totalorder %s18, 1
      %p50 = por %p48, %p49
      %p51 = scmp.ne.s32.totalorder %s40, %s41
      %p52 = scmp.eq.s32.totalorder %s18, 0
      %p53 = por %p51, %p52
      %p54 = scmp.ne.s32.totalorder %s40, %s41
      %p55 = scmp.eq.s32.totalorder %s19, 1
      %p56 = por %p54, %p55
      %p58 = scmp.ne.s32.totalorder %s41, %s57
      %p59 = scmp.eq.s32.totalorder %s19, 0
      %p60 = por %p58, %p59
      %s61 = ssub.s32 %s20, %s32
      %s62 = ssub.s32 %s21, %s28
      %s63 = sor.u32 %s61, %s62
      %p64 = scmp.eq.s32.totalorder %s63, 0
      %s66 = sadd.s32 %s65, 1
      %s67 = scalar_select %p64, %s65, %s66
      %p70 = pneg %p64
      %p71 = scmp.eq.s32.totalorder %s13, 1
      %p72 = por %p70, %p71
      %p73 = scmp.ne.s32.totalorder %s65, %s68
      %p74 = scmp.eq.s32.totalorder %s13, 0
      %p75 = por %p73, %p74
      %p76 = scmp.ne.s32.totalorder %s65, %s68
      %p77 = scmp.eq.s32.totalorder %s18, 1
      %p78 = por %p76, %p77
      %p79 = scmp.ne.s32.totalorder %s68, %s69
      %p80 = scmp.eq.s32.totalorder %s18, 0
      %p81 = por %p79, %p80
      %p82 = scmp.ne.s32.totalorder %s68, %s69
      %p83 = scmp.eq.s32.totalorder %s19, 1
      %p84 = por %p82, %p83
      %p86 = scmp.ne.s32.totalorder %s69, %s85
      %p87 = scmp.eq.s32.totalorder %s19, 0
      %p88 = por %p86, %p87
      %p89 = scmp.le.s32.totalorder 1, %s13
      %p90 = scmp.lt.s32.totalorder %s13, 3
      %p91 = pnand %p89, %p90
      %p92 = pneg %p91
      // Predicated region
      $region9: #{tpu_custom_call.1} parent=5 // pred_check
        _
      $region10: #{tpu_custom_call.1} parent=5 // pred_check_branch
        %94 = sbr.rel (%p91) target = $region12
      $region11: #{tpu_custom_call.1} parent=5 // pred_region
        %s95 = ssub.s32 %s13, 1
      $region12: #{tpu_custom_call.1} parent=5 // pred_fallthru
        _
      %p96 = scmp.lt.s32.totalorder %s13, 2
      // Predicated region
      $region13: #{tpu_custom_call.1} parent=5 // pred_check
        %p97 = pneg %p96
      $region14: #{tpu_custom_call.1} parent=5 // pred_check_branch
        %99 = sbr.rel (%p97) target = $region16
      $region15: #{tpu_custom_call.1} parent=5 // pred_region
        // Predicated region
        $region17: #{tpu_custom_call.1} parent=15 // pred_check
          %p100 = pneg %p47
        $region18: #{tpu_custom_call.1} parent=15 // pred_check_branch
          %102 = sbr.rel (%p100) target = $region20
        $region19: #{tpu_custom_call.1} parent=15 // pred_region
          %s103 = sand.u32 %s37, 1
          %s104 = scalar_lea.sflag [#allocation3], %s103
          %s105 = sand.u32 %s37, 1
          %s106 = smul.addr %s105, 8
          %s107 = scalar_lea.vmem [#allocation2], %s106
          %s108 = smul.u32 2, %s21
          %s110 = ssub.s32 128, 128
          %111 = vsyncadd %s104, %s110
          %s112 = smul.addr %s20, 2
          %s113 = sadd.s32 %s108, %s112
          %s114 = smul.addr %s113, 64
          %s115 = scalar_lea.hbm %s0, %s114
          %s117 = sshll.u32 %s107, 4
          %s118 = int_to_ptr.vmem [resolvable:$true] %s117
          %120 = dma.hbm_to_vmem [thread:$0]  %s115, 128, %s118, %s104
        $region20: #{tpu_custom_call.1} parent=15 // pred_fallthru
          _
      $region16: #{tpu_custom_call.1} parent=5 // pred_fallthru
        _
      %p121 = scmp.le.s32.totalorder 1, %s13
      %p122 = scmp.lt.s32.totalorder %s13, 3
      %p123 = pnand %p121, %p122
      %p124 = pneg %p123
      // Predicated region
      $region21: #{tpu_custom_call.1} parent=5 // pred_check
        _
      $region22: #{tpu_custom_call.1} parent=5 // pred_check_branch
        %126 = sbr.rel (%p123) target = $region24
      $region23: #{tpu_custom_call.1} parent=5 // pred_region
        %s127 = ssub.s32 %s13, 1
        %s128 = sand.u32 %s40, 1
        %s129 = scalar_lea.sflag [#allocation3], %s128
        %s130 = sand.u32 %s40, 1
        %s131 = smul.addr %s130, 8
        %s132 = scalar_lea.vmem [#allocation2], %s131
        // Predicated region
        $region25: #{tpu_custom_call.1} parent=23 // pred_check
          %p133 = pneg %p53
        $region26: #{tpu_custom_call.1} parent=23 // pred_check_branch
          %135 = sbr.rel (%p133) target = $region28
        $region27: #{tpu_custom_call.1} parent=23 // pred_region
          %136 = dma.done %s129, 128
        $region28: #{tpu_custom_call.1} parent=23 // pred_fallthru
          _
        %s137 = sand.u32 %s40, 1
        %s138 = scalar_lea.sflag [#allocation3], %s137
        %s139 = sand.u32 %s40, 1
        %s140 = smul.addr %s139, 8
        %s141 = scalar_lea.vmem [#allocation2], %s140
        %p142 = pneg %p53
        %p143 = pneg %p50
        %p144 = pneg %p81
        %p145 = pneg %p78
        %s146 = sand.u32 %s68, 1
        %s147 = scalar_lea.sflag [#allocation4], %s146
        %s148 = sand.u32 %s68, 1
        %s149 = smul.addr %s148, 8
        %s150 = scalar_lea.vmem [#allocation5], %s149
        %s151 = smul.u32 2, %s23
        %s152 = smul.u32 2, %s23
        %v153 = vld [vmem:[%s132] sm:$0xff]
        %v154 = vmul.f32 %v153, %v153
        %v156 = vrot.slane %v154, 5
        %v157 = vrot.slane %v156, 4
        %v159 = vadd.f32 %v154, %v157
        %v160 = vrot.slane %v154, 6
        %v161 = vrot.slane %v160, 4
        %v163 = vadd.f32 %v159, %v161
        %v164 = vrot.slane %v154, 7
        %v165 = vrot.slane %v164, 4
        %v167 = vadd.f32 %v163, %v165
        %v168 = vmax.f32 %v167, 1e-16
        %v169 = vrsqrt.pop %v168
        %v171 = vlaneseq
        %v172 = vshrl.u32 %v171, 7
        %v173 = vsub.s32 0, %v172
        %v174 = vrot.slane %v169, %v173
        %v175 = vlaneseq
        %v176 = vshrl.u32 %v175, 7
        %v177 = vsub.s32 4, %v176
        %v178 = vrot.slane %v169, %v177
        %v181 = vlaneseq
        %v182 = vshrl.u32 %v181, 7
        %v183 = vsub.s32 0, %v182
        %v184 = vrot.slane %v174, %v183
        %v185 = vlaneseq
        %v186 = vshrl.u32 %v185, 7
        %v187 = vsub.s32 0, %v186
        %v188 = vrot.slane %v178, %v187
        %v191 = vcombine.low %v184, %v188
        %v193 = vmul.f32 %v153, %v191
        %194 = vst [vmem:[%s150] sm:$0xff] %v193
        %s195 = sand.u32 %s68, 1
        %s196 = scalar_lea.sflag [#allocation4], %s195
        %s197 = sand.u32 %s68, 1
        %s198 = smul.addr %s197, 8
        %s199 = scalar_lea.vmem [#allocation5], %s198
        // Predicated region
        $region29: #{tpu_custom_call.1} parent=23 // pred_check
          %p200 = pneg %p78
        $region30: #{tpu_custom_call.1} parent=23 // pred_check_branch
          %202 = sbr.rel (%p200) target = $region32
        $region31: #{tpu_custom_call.1} parent=23 // pred_region
          %s203 = smul.u32 2, %s23
          %s205 = ssub.s32 128, 128
          %206 = vsyncadd %s196, %s205
          %s207 = smul.addr %s22, 2
          %s208 = sadd.s32 %s203, %s207
          %s209 = smul.addr %s208, 64
          %s210 = scalar_lea.hbm %s1, %s209
          %s212 = sshll.u32 %s199, 4
          %s213 = int_to_ptr.vmem [resolvable:$true] %s212
          %215 = dma.vmem_to_hbm [thread:$0]  %s213, 128, %s210, %s196
        $region32: #{tpu_custom_call.1} parent=23 // pred_fallthru
          _
      $region24: #{tpu_custom_call.1} parent=5 // pred_fallthru
        _
      %p216 = scmp.le.s32.totalorder 2, %s13
      // Predicated region
      $region33: #{tpu_custom_call.1} parent=5 // pred_check
        %p217 = pneg %p216
      $region34: #{tpu_custom_call.1} parent=5 // pred_check_branch
        %219 = sbr.rel (%p217) target = $region36
      $region35: #{tpu_custom_call.1} parent=5 // pred_region
        %s220 = ssub.s32 %s13, 2
        // Predicated region
        $region37: #{tpu_custom_call.1} parent=35 // pred_check
          %p221 = pneg %p84
        $region38: #{tpu_custom_call.1} parent=35 // pred_check_branch
          %223 = sbr.rel (%p221) target = $region40
        $region39: #{tpu_custom_call.1} parent=35 // pred_region
          %s224 = sand.u32 %s69, 1
          %s225 = scalar_lea.sflag [#allocation4], %s224
          %s226 = sand.u32 %s69, 1
          %s227 = smul.addr %s226, 8
          %s228 = scalar_lea.vmem [#allocation5], %s227
          %229 = dma.done %s225, 128
        $region40: #{tpu_custom_call.1} parent=35 // pred_fallthru
          _
      $region36: #{tpu_custom_call.1} parent=5 // pred_fallthru
        _
    $region6: #{tpu_custom_call.1} parent=1 // loop_footer
      %s17 = sadd.s32 1, %s13
    $region7: #{tpu_custom_call.1} parent=1 // loop_footer_branch
      %12 = sbr.rel target = $region3
    $region8: #{tpu_custom_call.1} parent=1 // loop_exit
      _
    %230 = vsyncpa [#allocation3], 1
    %s231 = scalar_lea.sflag [#allocation3], 1
    %232 = vsyncpa %s231, 1
    %233 = vsyncpa [#allocation4], 1
    %s234 = scalar_lea.sflag [#allocation4], 1
    %235 = vsyncpa %s234, 1

</llo_original>
